<compile_context>
chip_gen: v5e
topology: v5e:2x2
jax: 0.10.0
libtpu: 0.0.40
codegen_flags: <defaults>
</compile_context>

<pallas_src>
import functools

import jax
import jax.numpy as jnp
from jax.experimental import pallas as pl
from jax.experimental.pallas import tpu as pltpu


LANES = 128

# rows (within the "bias" section of the packed slab)
_CB1, _CB2M, _FB1, _FB2A, _FB2C, _FB2M = range(6)


# ----------------------------------------------------------------------------
# Static layout of the packed parameter slab (lane width 128)
# ----------------------------------------------------------------------------
def _slab_layout(communication_size, goal_size, memory_size, hidden_size,
                 action_space_size, coms_len):
    layout = {}
    row = 0

    def add(name, nrows, ncols):
        nonlocal row
        layout[name] = (row, nrows, ncols)
        row += -(-nrows // 8) * 8  # keep every section sublane(8)-aligned

    add("cw1",   communication_size + memory_size, hidden_size)  # com Linear-1 (kept whole)
    add("cw2m",  hidden_size, memory_size)                       # com Linear-2, memory cols only
    add("fw1gm", goal_size + memory_size, hidden_size)           # final Linear-1, goal+mem rows
    add("fw2a",  hidden_size, action_space_size)                 # final Linear-2, action cols
    add("fw2c",  hidden_size, coms_len)                          # final Linear-2, coms cols (overlapping slice)
    add("fw2m",  hidden_size, memory_size)                       # final Linear-2, memory-delta cols
    add("bias",  6, LANES)                                       # 6 bias rows (see _CB1.._FB2M)
    return layout, row


# ----------------------------------------------------------------------------
# Fused forward kernel
# ----------------------------------------------------------------------------
def _policy_fused_kernel(p_ref, noise_ref, x_ref, com_mem_ref, fin_mem_ref,
                         act_sym_ref, new_com_mem_ref, new_fin_mem_ref,
                         *, layout, hidden_size, memory_size,
                         action_space_size, coms_len, n_streams):
    f32 = jnp.float32

    def w(name):                        # static carve of the packed param slab
        r0, nr, nc = layout[name]
        return p_ref[r0:r0 + nr, 0:nc]

    def b(i, ncols):                    # bias row i of the bias section
        r0 = layout["bias"][0] + i
        return p_ref[r0:r0 + 1, 0:ncols]

    def relu(v):
        return jnp.maximum(v, 0.0)

    com_width = layout["cw1"][1]        # communication_size + memory_size
    fin_width = layout["fw1gm"][1]      # goal_size + memory_size

    # --- shared communication module (all streams at once, 1 dot per Linear) --
    com_mem = com_mem_ref[...]                                        # (C, mem)
    x_com = x_ref[0:n_streams, 0:com_width]                           # [com | com_mem]
    ch = relu(jnp.dot(x_com, w("cw1"), preferred_element_type=f32)
              + b(_CB1, hidden_size))                                 # (C, hidden)
    # Only the memory columns of the 2nd Linear are live (pooling note below);
    # column-split at init so the result pops lane-0 aligned.
    delta_cm = relu(jnp.dot(ch, w("cw2m"), preferred_element_type=f32)
                    + b(_CB2M, memory_size))                          # (C, mem)
    eps_com = noise_ref[0:n_streams, 0:memory_size]
    new_com_mem_ref[...] = jnp.tanh(com_mem + delta_cm + eps_com)

    # --- pooling + final layer -------------------------------------------------
    # sum(softmax(stack, dim=0), dim=0) == ones(hidden) identically, so the
    # pooled communication / physical features are constants; ones @ fw1[:2h]
    # was folded into fb1 at init and the physical-obs MLP never reaches the
    # outputs (exactly the reference forward math).
    fin_mem = fin_mem_ref[...]                                        # (1, mem)
    x_fin = x_ref[n_streams:n_streams + 1, 0:fin_width]               # [goal | final_mem]
    fh = relu(jnp.dot(x_fin, w("fw1gm"), preferred_element_type=f32)
              + b(_FB1, hidden_size))                                 # (1, hidden)

    # final memory update: delta = final_output[-mem:]
    delta_fm = (jnp.dot(fh, w("fw2m"), preferred_element_type=f32)
                + b(_FB2M, memory_size))                              # (1, mem)
    eps_fin = noise_ref[n_streams:n_streams + 1, 0:memory_size]
    new_fin_mem_ref[...] = jnp.tanh(fin_mem + delta_fm + eps_fin)

    # action = final_output[:action_space] + N(0,1)
    actions = (jnp.dot(fh, w("fw2a"), preferred_element_type=f32)
               + b(_FB2A, action_space_size))                         # (1, a)
    eps_act = noise_ref[n_streams + 1:n_streams + 2, 0:action_space_size]
    action_row = actions + eps_act

    # communication symbol = gumbel_softmax(final_output[a-1 : mem+1], tau=1)
    coms = (jnp.dot(fh, w("fw2c"), preferred_element_type=f32)
            + b(_FB2C, coms_len))                                     # (1, coms_len)
    gumbel = noise_ref[n_streams + 2:n_streams + 3, 0:coms_len]
    logits = coms + gumbel                                            # tau = 1
    m = jnp.max(logits, axis=-1, keepdims=True)
    e = jnp.exp(logits - m)
    symbol_row = e / jnp.sum(e, axis=-1, keepdims=True)               # hard=False

    # One packed output slab (single writeback DMA): row 0 = action,
    # row 1 = communication symbol, both stored lane-0 aligned.
    act_sym_ref[...] = jnp.zeros(act_sym_ref.shape, f32)
    act_sym_ref[0:1, 0:action_space_size] = action_row
    act_sym_ref[1:2, 0:coms_len] = symbol_row


# ----------------------------------------------------------------------------
# Parameter construction (PyTorch-Linear-style init) + slab packing
# ----------------------------------------------------------------------------
def linear_params(key, fan_in, fan_out):
    kw, kb = jax.random.split(key)
    bound = 1.0 / jnp.sqrt(jnp.float32(fan_in))
    w = jax.random.uniform(kw, (fan_in, fan_out), jnp.float32, -bound, bound)
    b = jax.random.uniform(kb, (1, fan_out), jnp.float32, -bound, bound)
    return w, b


def init_packed_params(key, communication_size, state_size, action_space_size,
                       goal_size, memory_size, hidden_size):
    coms_len = (memory_size + 1) - (action_space_size - 1)
    keys = jax.random.split(key, 6)

    # shared_communication_module
    cw1, cb1 = linear_params(keys[0], communication_size + memory_size, hidden_size)
    cw2, cb2 = linear_params(keys[1], hidden_size, hidden_size + memory_size)
    # shared_pyhisical_observation_module: created for parity with the module,
    # but mathematically dead (softmax-over-streams pooling sums to ones).
    _pw1, _pb1 = linear_params(keys[2], state_size, hidden_size)
    _pw2, _pb2 = linear_params(keys[3], hidden_size, hidden_size)
    # final_layer
    fin_in = 2 * hidden_size + goal_size + memory_size
    fin_out = action_space_size + communication_size + memory_size
    fw1, fb1 = linear_params(keys[4], fin_in, hidden_size)
    fw2, fb2 = linear_params(keys[5], hidden_size, fin_out)

    # Pooling fold: pooled features == ones, so ones @ fw1[:2*hidden] is a
    # constant that merges into the bias.
    fb1_eff = fb1 + jnp.sum(fw1[:2 * hidden_size], axis=0, keepdims=True)
    fw1_gm = fw1[2 * hidden_size:]                       # (goal+mem, hidden)

    # Column splits (done once at init, zero in-kernel lane realignment).
    cw2_m, cb2_m = cw2[:, hidden_size:], cb2[:, hidden_size:]
    a = action_space_size
    fw2_a, fb2_a = fw2[:, :a], fb2[:, :a]
    fw2_c = fw2[:, a - 1:a - 1 + coms_len]               # faithful overlapping slice
    fb2_c = fb2[:, a - 1:a - 1 + coms_len]
    fw2_m, fb2_m = fw2[:, -memory_size:], fb2[:, -memory_size:]

    layout, total_rows = _slab_layout(communication_size, goal_size, memory_size,
                                      hidden_size, action_space_size, coms_len)
    slab = jnp.zeros((total_rows, LANES), jnp.float32)
    for name, mat in (("cw1", cw1), ("cw2m", cw2_m), ("fw1gm", fw1_gm),
                      ("fw2a", fw2_a), ("fw2c", fw2_c), ("fw2m", fw2_m)):
        r0, _, _ = layout[name]
        slab = slab.at[r0:r0 + mat.shape[0], 0:mat.shape[1]].set(mat)
    b_r0 = layout["bias"][0]
    for i, vec in enumerate((cb1, cb2_m, fb1_eff, fb2_a, fb2_c, fb2_m)):
        slab = slab.at[b_r0 + i, 0:vec.shape[1]].set(vec[0])

    return {"slab": slab, "layout": layout}


# ----------------------------------------------------------------------------
# Forward pass: ONE fused pallas_call
# ----------------------------------------------------------------------------
def policy_forward(packed, physical_observations, communication_streams,
                   private_goal, com_memory, final_memory, noise_key, *,
                   memory_size, action_space_size, hidden_size):
    # physical_observations never influence the outputs (pooling == ones); kept
    # in the signature for interface parity with the reference module.
    del physical_observations

    layout = packed["layout"]
    communication_streams = jnp.asarray(communication_streams, jnp.float32)
    com_memory = jnp.asarray(com_memory, jnp.float32)
    private_goal = jnp.asarray(private_goal, jnp.float32).reshape(1, -1)
    final_memory = jnp.asarray(final_memory, jnp.float32).reshape(1, -1)

    n_streams = communication_streams.shape[0]
    coms_len = (memory_size + 1) - (action_space_size - 1)
    assert coms_len > 0
    com_width = layout["cw1"][1]        # communication + memory
    fin_width = layout["fw1gm"][1]      # goal + memory

    # Host-side operand packing (layout plumbing, fuses to a pad/concat under
    # jit): row i<C = [com_i | com_mem_i], row C = [goal | final_mem].
    width = max(com_width, fin_width)
    x_slab = jnp.zeros((n_streams + 1, width), jnp.float32)
    x_slab = x_slab.at[0:n_streams, 0:com_width].set(
        jnp.concatenate([communication_streams, com_memory], axis=1))
    x_slab = x_slab.at[n_streams, 0:fin_width].set(
        jnp.concatenate([private_goal, final_memory], axis=1)[0])

    # All noise in one lane-dense slab: rows [0,C) com-memory eps, row C final-
    # memory eps, row C+1 action eps (all N(0,1)), row C+2 Gumbel noise.
    k_n, k_g = jax.random.split(noise_key)
    normal = jax.random.normal(k_n, (n_streams + 2, LANES), jnp.float32)
    gumbel = jax.random.gumbel(k_g, (1, LANES), jnp.float32)
    noise = jnp.concatenate([normal, gumbel], axis=0)

    kernel = functools.partial(
        _policy_fused_kernel, layout=layout, hidden_size=hidden_size,
        memory_size=memory_size, action_space_size=action_space_size,
        coms_len=coms_len, n_streams=n_streams)

    vmem = pl.BlockSpec(memory_space=pltpu.MemorySpace.VMEM)
    out_shape = (
        jax.ShapeDtypeStruct((2, LANES), jnp.float32),                 # action | symbol
        jax.ShapeDtypeStruct((n_streams, memory_size), jnp.float32),   # new com memory
        jax.ShapeDtypeStruct((1, memory_size), jnp.float32),           # new final memory
    )
    act_sym, new_com_memory, new_final_memory = pl.pallas_call(
        kernel,
        out_shape=out_shape,
        in_specs=[vmem] * 5,
        out_specs=(vmem, vmem, vmem),
        # recurrent state updated in place: com_memory -> out 1, final_memory -> out 2
        input_output_aliases={3: 1, 4: 2},
    )(packed["slab"], noise, x_slab, com_memory, final_memory)

    action = act_sym[0, :action_space_size]
    communication_symbol = act_sym[1, :coms_len]
    return (action, communication_symbol), (new_com_memory, new_final_memory)


# ----------------------------------------------------------------------------
# Main
# ----------------------------------------------------------------------------
if __name__ == "__main__":
    communication_size = 8
    num_communication_streams = 3
    state_size = 16
    action_space_size = 4
    goal_size = 6
    memory_size = 8
    hidden_size = 32
    num_physical_obs = 2
    coms_len = (memory_size + 1) - (action_space_size - 1)

    root = jax.random.PRNGKey(0)
    k_params, k_obs, k_com, k_goal, k_noise = jax.random.split(root, 5)

    packed = init_packed_params(k_params, communication_size, state_size,
                                action_space_size, goal_size, memory_size,
                                hidden_size)

    physical_observations = jax.random.normal(
        k_obs, (num_physical_obs, state_size), jnp.float32)
    communication_streams = jax.random.normal(
        k_com, (num_communication_streams, communication_size), jnp.float32)
    private_goal = jax.random.normal(k_goal, (1, goal_size), jnp.float32)
    com_memory = jnp.zeros((num_communication_streams, memory_size), jnp.float32)
    final_memory = jnp.zeros((1, memory_size), jnp.float32)

    (action, communication_symbol), (new_com_mem, new_final_mem) = policy_forward(
        packed, physical_observations, communication_streams, private_goal,
        com_memory, final_memory, k_noise,
        memory_size=memory_size, action_space_size=action_space_size,
        hidden_size=hidden_size)

    jax.block_until_ready((action, communication_symbol, new_com_mem, new_final_mem))

    assert action.shape == (action_space_size,)
    assert communication_symbol.shape == (coms_len,)
    assert new_com_mem.shape == (num_communication_streams, memory_size)
    assert new_final_mem.shape == (1, memory_size)
    assert bool(jnp.all(jnp.isfinite(action)))
    assert bool(jnp.all(jnp.isfinite(communication_symbol)))
    assert bool(jnp.all(jnp.isfinite(new_com_mem)))
    assert bool(jnp.all(jnp.isfinite(new_final_mem)))
    assert abs(float(jnp.sum(communication_symbol)) - 1.0) < 1e-3
    print("KERNEL_OK")
</pallas_src>

<mosaic_0001>
module attributes {stable_mosaic.version = 11 : i64} {
  func.func @_policy_fused_kernel(%arg0: memref<168x128xf32, #tpu.memory_space<vmem>>, %arg1: memref<6x128xf32, #tpu.memory_space<vmem>>, %arg2: memref<4x16xf32, #tpu.memory_space<vmem>>, %arg3: memref<3x8xf32, #tpu.memory_space<vmem>>, %arg4: memref<1x8xf32, #tpu.memory_space<vmem>>, %arg5: memref<2x128xf32, #tpu.memory_space<vmem>>, %arg6: memref<3x8xf32, #tpu.memory_space<vmem>>, %arg7: memref<1x8xf32, #tpu.memory_space<vmem>>) attributes {dimension_semantics = [], scalar_prefetch = 0 : i64, scratch_operands = 0 : i64, tpu.core_type = #tpu.core_type<tc>} {
    %c0 = arith.constant 0 : index
    %c0_0 = arith.constant 0 : index
    %0 = vector.load %arg3[%c0, %c0_0] : memref<3x8xf32, #tpu.memory_space<vmem>>, vector<3x8xf32>
    %c0_1 = arith.constant 0 : index
    %c0_2 = arith.constant 0 : index
    %1 = vector.load %arg2[%c0_1, %c0_2] : memref<4x16xf32, #tpu.memory_space<vmem>>, vector<3x16xf32>
    %c0_3 = arith.constant 0 : index
    %c0_4 = arith.constant 0 : index
    %2 = vector.load %arg0[%c0_3, %c0_4] : memref<168x128xf32, #tpu.memory_space<vmem>>, vector<16x32xf32>
    %cst = arith.constant dense<0.000000e+00> : vector<3x32xf32>
    %3 = tpu.matmul %1, %2, %cst {dimension_numbers = #tpu.dot_dimension_numbers<[1], [0], [0], [1], [0, 0, 1, 1], [], []>} : vector<3x16xf32>, vector<16x32xf32>, vector<3x32xf32> -> vector<3x32xf32>
    %c160 = arith.constant 160 : index
    %c0_5 = arith.constant 0 : index
    %4 = vector.load %arg0[%c160, %c0_5] : memref<168x128xf32, #tpu.memory_space<vmem>>, vector<1x32xf32>
    %5 = vector.broadcast %4 : vector<1x32xf32> to vector<3x32xf32>
    %6 = arith.addf %3, %5 : vector<3x32xf32>
    %cst_6 = arith.constant 0.000000e+00 : f32
    %7 = vector.broadcast %cst_6 : f32 to vector<3x32xf32>
    %8 = arith.maximumf %6, %7 : vector<3x32xf32>
    %c16 = arith.constant 16 : index
    %c0_7 = arith.constant 0 : index
    %9 = vector.load %arg0[%c16, %c0_7] : memref<168x128xf32, #tpu.memory_space<vmem>>, vector<32x8xf32>
    %cst_8 = arith.constant dense<0.000000e+00> : vector<3x8xf32>
    %10 = tpu.matmul %8, %9, %cst_8 {dimension_numbers = #tpu.dot_dimension_numbers<[1], [0], [0], [1], [0, 0, 1, 1], [], []>} : vector<3x32xf32>, vector<32x8xf32>, vector<3x8xf32> -> vector<3x8xf32>
    %c161 = arith.constant 161 : index
    %c0_9 = arith.constant 0 : index
    %11 = vector.load %arg0[%c161, %c0_9] : memref<168x128xf32, #tpu.memory_space<vmem>>, vector<1x8xf32>
    %12 = vector.broadcast %11 : vector<1x8xf32> to vector<3x8xf32>
    %13 = arith.addf %10, %12 : vector<3x8xf32>
    %cst_10 = arith.constant 0.000000e+00 : f32
    %14 = vector.broadcast %cst_10 : f32 to vector<3x8xf32>
    %15 = arith.maximumf %13, %14 : vector<3x8xf32>
    %c0_11 = arith.constant 0 : index
    %c0_12 = arith.constant 0 : index
    %16 = vector.load %arg1[%c0_11, %c0_12] : memref<6x128xf32, #tpu.memory_space<vmem>>, vector<3x8xf32>
    %17 = arith.addf %0, %15 : vector<3x8xf32>
    %18 = arith.addf %17, %16 : vector<3x8xf32>
    %19 = math.tanh %18 : vector<3x8xf32>
    %c0_13 = arith.constant 0 : index
    %c0_14 = arith.constant 0 : index
    %20 = vector.load %arg6[%c0_13, %c0_14] : memref<3x8xf32, #tpu.memory_space<vmem>>, vector<3x8xf32>
    tpu.vector_store %arg6[%c0_13, %c0_14], %19 {strides = array<i32>} : memref<3x8xf32, #tpu.memory_space<vmem>>, vector<3x8xf32>,
    %c0_15 = arith.constant 0 : index
    %c0_16 = arith.constant 0 : index
    %21 = vector.load %arg4[%c0_15, %c0_16] : memref<1x8xf32, #tpu.memory_space<vmem>>, vector<1x8xf32>
    %c3 = arith.constant 3 : index
    %c0_17 = arith.constant 0 : index
    %22 = vector.load %arg2[%c3, %c0_17] : memref<4x16xf32, #tpu.memory_space<vmem>>, vector<1x14xf32>
    %c48 = arith.constant 48 : index
    %c0_18 = arith.constant 0 : index
    %23 = vector.load %arg0[%c48, %c0_18] : memref<168x128xf32, #tpu.memory_space<vmem>>, vector<14x32xf32>
    %cst_19 = arith.constant dense<0.000000e+00> : vector<1x32xf32>
    %24 = tpu.matmul %22, %23, %cst_19 {dimension_numbers = #tpu.dot_dimension_numbers<[1], [0], [0], [1], [0, 0, 1, 1], [], []>} : vector<1x14xf32>, vector<14x32xf32>, vector<1x32xf32> -> vector<1x32xf32>
    %c162 = arith.constant 162 : index
    %c0_20 = arith.constant 0 : index
    %25 = vector.load %arg0[%c162, %c0_20] : memref<168x128xf32, #tpu.memory_space<vmem>>, vector<1x32xf32>
    %26 = arith.addf %24, %25 : vector<1x32xf32>
    %cst_21 = arith.constant 0.000000e+00 : f32
    %27 = vector.broadcast %cst_21 : f32 to vector<1x32xf32>
    %28 = arith.maximumf %26, %27 : vector<1x32xf32>
    %c128 = arith.constant 128 : index
    %c0_22 = arith.constant 0 : index
    %29 = vector.load %arg0[%c128, %c0_22] : memref<168x128xf32, #tpu.memory_space<vmem>>, vector<32x8xf32>
    %cst_23 = arith.constant dense<0.000000e+00> : vector<1x8xf32>
    %30 = tpu.matmul %28, %29, %cst_23 {dimension_numbers = #tpu.dot_dimension_numbers<[1], [0], [0], [1], [0, 0, 1, 1], [], []>} : vector<1x32xf32>, vector<32x8xf32>, vector<1x8xf32> -> vector<1x8xf32>
    %c165 = arith.constant 165 : index
    %c0_24 = arith.constant 0 : index
    %31 = vector.load %arg0[%c165, %c0_24] : memref<168x128xf32, #tpu.memory_space<vmem>>, vector<1x8xf32>
    %32 = arith.addf %30, %31 : vector<1x8xf32>
    %c3_25 = arith.constant 3 : index
    %c0_26 = arith.constant 0 : index
    %33 = vector.load %arg1[%c3_25, %c0_26] : memref<6x128xf32, #tpu.memory_space<vmem>>, vector<1x8xf32>
    %34 = arith.addf %21, %32 : vector<1x8xf32>
    %35 = arith.addf %34, %33 : vector<1x8xf32>
    %36 = math.tanh %35 : vector<1x8xf32>
    %c0_27 = arith.constant 0 : index
    %c0_28 = arith.constant 0 : index
    %37 = vector.load %arg7[%c0_27, %c0_28] : memref<1x8xf32, #tpu.memory_space<vmem>>, vector<1x8xf32>
    tpu.vector_store %arg7[%c0_27, %c0_28], %36 {strides = array<i32>} : memref<1x8xf32, #tpu.memory_space<vmem>>, vector<1x8xf32>,
    %c64 = arith.constant 64 : index
    %c0_29 = arith.constant 0 : index
    %38 = vector.load %arg0[%c64, %c0_29] : memref<168x128xf32, #tpu.memory_space<vmem>>, vector<32x4xf32>
    %cst_30 = arith.constant dense<0.000000e+00> : vector<1x4xf32>
    %39 = tpu.matmul %28, %38, %cst_30 {dimension_numbers = #tpu.dot_dimension_numbers<[1], [0], [0], [1], [0, 0, 1, 1], [], []>} : vector<1x32xf32>, vector<32x4xf32>, vector<1x4xf32> -> vector<1x4xf32>
    %c163 = arith.constant 163 : index
    %c0_31 = arith.constant 0 : index
    %40 = vector.load %arg0[%c163, %c0_31] : memref<168x128xf32, #tpu.memory_space<vmem>>, vector<1x4xf32>
    %41 = arith.addf %39, %40 : vector<1x4xf32>
    %c4 = arith.constant 4 : index
    %c0_32 = arith.constant 0 : index
    %42 = vector.load %arg1[%c4, %c0_32] : memref<6x128xf32, #tpu.memory_space<vmem>>, vector<1x4xf32>
    %43 = arith.addf %41, %42 : vector<1x4xf32>
    %c96 = arith.constant 96 : index
    %c0_33 = arith.constant 0 : index
    %44 = vector.load %arg0[%c96, %c0_33] : memref<168x128xf32, #tpu.memory_space<vmem>>, vector<32x6xf32>
    %cst_34 = arith.constant dense<0.000000e+00> : vector<1x6xf32>
    %45 = tpu.matmul %28, %44, %cst_34 {dimension_numbers = #tpu.dot_dimension_numbers<[1], [0], [0], [1], [0, 0, 1, 1], [], []>} : vector<1x32xf32>, vector<32x6xf32>, vector<1x6xf32> -> vector<1x6xf32>
    %c164 = arith.constant 164 : index
    %c0_35 = arith.constant 0 : index
    %46 = vector.load %arg0[%c164, %c0_35] : memref<168x128xf32, #tpu.memory_space<vmem>>, vector<1x6xf32>
    %47 = arith.addf %45, %46 : vector<1x6xf32>
    %c5 = arith.constant 5 : index
    %c0_36 = arith.constant 0 : index
    %48 = vector.load %arg1[%c5, %c0_36] : memref<6x128xf32, #tpu.memory_space<vmem>>, vector<1x6xf32>
    %49 = arith.addf %47, %48 : vector<1x6xf32>
    %cst_37 = arith.constant dense<0xFF800000> : vector<1xf32>
    %50 = vector.multi_reduction <maximumf>, %49, %cst_37 [1] : vector<1x6xf32> to vector<1xf32>
    %51 = vector.shape_cast %50 : vector<1xf32> to vector<1x1xf32>
    %52 = vector.broadcast %51 : vector<1x1xf32> to vector<1x6xf32>
    %53 = arith.subf %49, %52 : vector<1x6xf32>
    %54 = math.exp %53 : vector<1x6xf32>
    %cst_38 = arith.constant dense<0.000000e+00> : vector<1xf32>
    %55 = vector.multi_reduction <add>, %54, %cst_38 [1] : vector<1x6xf32> to vector<1xf32>
    %56 = vector.shape_cast %55 : vector<1xf32> to vector<1x1xf32>
    %57 = vector.broadcast %56 : vector<1x1xf32> to vector<1x6xf32>
    %58 = arith.divf %54, %57 : vector<1x6xf32>
    %cst_39 = arith.constant 0.000000e+00 : f32
    %59 = vector.broadcast %cst_39 : f32 to vector<2x128xf32>
    %c0_40 = arith.constant 0 : index
    %c0_41 = arith.constant 0 : index
    %60 = vector.load %arg5[%c0_40, %c0_41] : memref<2x128xf32, #tpu.memory_space<vmem>>, vector<2x128xf32>
    tpu.vector_store %arg5[%c0_40, %c0_41], %59 {strides = array<i32>} : memref<2x128xf32, #tpu.memory_space<vmem>>, vector<2x128xf32>,
    %c0_42 = arith.constant 0 : index
    %c0_43 = arith.constant 0 : index
    %61 = vector.load %arg5[%c0_42, %c0_43] : memref<2x128xf32, #tpu.memory_space<vmem>>, vector<1x4xf32>
    tpu.vector_store %arg5[%c0_42, %c0_43], %43 {strides = array<i32>} : memref<2x128xf32, #tpu.memory_space<vmem>>, vector<1x4xf32>,
    %c1 = arith.constant 1 : index
    %c0_44 = arith.constant 0 : index
    %62 = vector.load %arg5[%c1, %c0_44] : memref<2x128xf32, #tpu.memory_space<vmem>>, vector<1x6xf32>
    tpu.vector_store %arg5[%c1, %c0_44], %58 {strides = array<i32>} : memref<2x128xf32, #tpu.memory_space<vmem>>, vector<1x6xf32>,
    return
  }
}

</mosaic_0001>

<llo_original>
// kernel: tpu_custom_call.1
$region0: #{tpu_custom_call.1}
  #allocation0 [shape = 'u32[]', space=smem, size = 0x4, offset = 0x4, fixed_abs, tag = 'smem constant byte address 0x4 - core index']
  #allocation1 [shape = 'u32[72,128]{1,0:T(1,128)}', space=vmem, size = 0x9000, scoped, tag = 'internal scratch']
  %s0 = inlined_call_operand.hbm [shape: f32[168,128], index: 0, kind: input, shape index: {}]
  %s1 = inlined_call_operand.vmem [shape: f32[6,128], index: 1, kind: input, shape index: {}]
  %s2 = inlined_call_operand.vmem [shape: f32[4,16], index: 2, kind: input, shape index: {}]
  %s3 = inlined_call_operand.hbm [shape: f32[3,8], index: 3, kind: input, shape index: {}, may-alias: {3,6}]
  %s4 = inlined_call_operand.hbm [shape: f32[1,8], index: 4, kind: input, shape index: {}, may-alias: {4,7}]
  %s5 = inlined_call_operand.hbm [shape: f32[2,128], index: 5, kind: output, shape index: {0}]
  %s6 = inlined_call_operand.hbm [shape: f32[3,8], index: 6, kind: output, shape index: {1}, may-alias: {3,6}]
  %s7 = inlined_call_operand.hbm [shape: f32[1,8], index: 7, kind: output, shape index: {2}, may-alias: {4,7}]
  %8 = xla_tuple %s5, %s6, %s7
  %s9 = sld [smem:[#allocation0]]
  $region58: #{tpu_custom_call.1} parent=0
    _
  %s11 = ssub.s32 1, %s9
  %s12 = scalar_select 0, %s11, %s9
  $region1: #{tpu_custom_call.1} parent=0
    #allocation2 [shape = 'u8[86016]{0}', space=vmem, size = 0x15000, scoped, tag = 'input window, operand 0, single buffered']
    #allocation3 [shape = 's32[1]{0}', space=sflag, size = 0x4, scoped, tag = 'scoped memory for tpu_custom_call.1']
    #allocation4 [shape = 's32[1]{0}', space=sflag, size = 0x4, scoped, tag = 'scoped memory for tpu_custom_call.1']
    #allocation5 [shape = 'u8[2048]{0}', space=vmem, size = 0x800, scoped, tag = 'input window, operand 3, single buffered']
    #allocation6 [shape = 's32[1]{0}', space=sflag, size = 0x4, scoped, tag = 'scoped memory for tpu_custom_call.1']
    #allocation7 [shape = 'u8[512]{0}', space=vmem, size = 0x400, scoped, tag = 'input window, operand 4, single buffered']
    #allocation8 [shape = 'u8[1024]{0}', space=vmem, size = 0x400, scoped, tag = 'output window, operand 0, single buffered']
    #allocation9 [shape = 'u8[2048]{0}', space=vmem, size = 0x800, scoped, tag = 'output window, operand 1, single buffered']
    #allocation10 [shape = 's32[1]{0}', space=sflag, size = 0x4, scoped, tag = 'scoped memory for tpu_custom_call.1']
    #allocation11 [shape = 'u8[512]{0}', space=vmem, size = 0x400, scoped, tag = 'output window, operand 2, single buffered']
    %13 = vsyncpa [#allocation3], 0
    %14 = vsyncpa [#allocation6], 0
    %15 = vsyncpa [#allocation4], 0
    %16 = vsyncpa [#allocation10], 0
    // Predicated region
    $region2: #{tpu_custom_call.1} parent=1 // pred_check
      _
    $region3: #{tpu_custom_call.1} parent=1 // pred_check_branch
      %18 = sbr.rel (0) target = $region5
    $region4: #{tpu_custom_call.1} parent=1 // pred_region
      %20 = vsyncadd [#allocation3], 0
      %s21 = sshll.u32 %s0, 4
      %s22 = int_to_ptr.hbm [resolvable:$true] %s21
      %s23 = sshll.u32 [#allocation2], 4
      %s24 = int_to_ptr.vmem [resolvable:$true] %s23
      %29 = dma.hbm_to_vmem [thread:$0]  %s22, 2688, %s24, [#allocation3], 128, 128, 8
    $region5: #{tpu_custom_call.1} parent=1 // pred_fallthru
      _
    // Predicated region
    $region6: #{tpu_custom_call.1} parent=1 // pred_check
      _
    $region7: #{tpu_custom_call.1} parent=1 // pred_check_branch
      %31 = sbr.rel (0) target = $region9
    $region8: #{tpu_custom_call.1} parent=1 // pred_region
      _
    $region9: #{tpu_custom_call.1} parent=1 // pred_fallthru
      _
    // Predicated region
    $region10: #{tpu_custom_call.1} parent=1 // pred_check
      _
    $region11: #{tpu_custom_call.1} parent=1 // pred_check_branch
      %33 = sbr.rel (0) target = $region13
    $region12: #{tpu_custom_call.1} parent=1 // pred_region
      _
    $region13: #{tpu_custom_call.1} parent=1 // pred_fallthru
      _
    // Predicated region
    $region14: #{tpu_custom_call.1} parent=1 // pred_check
      _
    $region15: #{tpu_custom_call.1} parent=1 // pred_check_branch
      %35 = sbr.rel (0) target = $region17
    $region16: #{tpu_custom_call.1} parent=1 // pred_region
      %37 = vsyncadd [#allocation6], 0
      %s39 = sshll.u32 %s3, 4
      %s40 = int_to_ptr.hbm [resolvable:$true] %s39
      %s41 = sshll.u32 [#allocation5], 4
      %s42 = int_to_ptr.vmem [resolvable:$true] %s41
      %44 = dma.hbm_to_vmem [thread:$0]  %s40, 64, %s42, [#allocation6]
    $region17: #{tpu_custom_call.1} parent=1 // pred_fallthru
      _
    // Predicated region
    $region18: #{tpu_custom_call.1} parent=1 // pred_check
      _
    $region19: #{tpu_custom_call.1} parent=1 // pred_check_branch
      %46 = sbr.rel (0) target = $region21
    $region20: #{tpu_custom_call.1} parent=1 // pred_region
      %48 = vsyncadd [#allocation6], 0
      %s50 = sshll.u32 %s4, 4
      %s51 = int_to_ptr.hbm [resolvable:$true] %s50
      %s52 = sshll.u32 [#allocation7], 4
      %s53 = int_to_ptr.vmem [resolvable:$true] %s52
      %55 = dma.hbm_to_vmem [thread:$0]  %s51, 16, %s53, [#allocation6]
    $region21: #{tpu_custom_call.1} parent=1 // pred_fallthru
      _
    // Predicated region
    $region22: #{tpu_custom_call.1} parent=1 // pred_check
      _
    $region23: #{tpu_custom_call.1} parent=1 // pred_check_branch
      %57 = sbr.rel (0) target = $region25
    $region24: #{tpu_custom_call.1} parent=1 // pred_region
      %59 = dma.done [#allocation3], 2688
    $region25: #{tpu_custom_call.1} parent=1 // pred_fallthru
      _
    // Predicated region
    $region26: #{tpu_custom_call.1} parent=1 // pred_check
      _
    $region27: #{tpu_custom_call.1} parent=1 // pred_check_branch
      %61 = sbr.rel (0) target = $region29
    $region28: #{tpu_custom_call.1} parent=1 // pred_region
      %63 = dma.done [#allocation6], 64
    $region29: #{tpu_custom_call.1} parent=1 // pred_fallthru
      _
    // Predicated region
    $region30: #{tpu_custom_call.1} parent=1 // pred_check
      _
    $region31: #{tpu_custom_call.1} parent=1 // pred_check_branch
      %65 = sbr.rel (0) target = $region33
    $region32: #{tpu_custom_call.1} parent=1 // pred_region
      %67 = dma.done [#allocation6], 16
    $region33: #{tpu_custom_call.1} parent=1 // pred_fallthru
      _
    %v68 = vld [vmem:[#allocation5] sm:$0x7]
    %v69 = vld [vmem:[%s2] sm:$0x7]
    %v70 = vld [vmem:[#allocation2] sm:$0xff]
    %v71 = vld [vmem:[#allocation2 + $0x8] sm:$0xff]
    %v72 = vld [vmem:[#allocation2 + $0xa0] sm:$0x1]
    %v73 = vperm.slane %v72, 0
    %vm74 = vcmask 130048
    %v76 = vsel %vm74, %v69, 0
    %78 = vmatpush.msra.mxu0 0.0
    %79 = vmatpush.msra.mxu0 0.0
    %80 = vmatpush.msra.mxu0 0.0
    %81 = vmatpush.msra.mxu0 0.0
    %82 = vmatpush.msra.mxu0 0.0
    %83 = vmatpush.msra.mxu0 0.0
    %84 = vmatpush.msra.mxu0 0.0
    %85 = vmatpush.msra.mxu0 0.0
    %86 = vmatpush.msra.mxu0 0.0
    %87 = vmatpush.msra.mxu0 0.0
    %88 = vmatpush.msra.mxu0 0.0
    %89 = vmatpush.msra.mxu0 0.0
    %90 = vmatpush.msra.mxu0 0.0
    %91 = vmatpush.msra.mxu0 0.0
    %92 = vmatpush.msra.mxu0 %v71
    %93 = vmatpush.msra.mxu0 %v70
    %94 = vmatmul.f32.gmra.mxu0 %v76
    %v95 = vpop.f32.mrf.mxu0
    %v96 = vadd.f32 %v73, %v95
    %97 = vdwg.mxu0
    %v98 = vmax.f32 %v96, 0.0
    %v99 = vld [vmem:[#allocation2 + $0x10] sm:$0xff]
    %v100 = vld [vmem:[#allocation2 + $0x18] sm:$0xff]
    %v101 = vld [vmem:[#allocation2 + $0x20] sm:$0xff]
    %v102 = vld [vmem:[#allocation2 + $0x28] sm:$0xff]
    %v103 = vld [vmem:[#allocation2 + $0xa1] sm:$0x1]
    %v104 = vperm.slane %v103, 0
    %vm105 = vcmask 261120
    %v107 = vsel %vm105, %v98, 0
    %109 = vmatpush.msra.mxu0 0.0
    %110 = vmatpush.msra.mxu0 0.0
    %111 = vmatpush.msra.mxu0 0.0
    %112 = vmatpush.msra.mxu0 0.0
    %113 = vmatpush.msra.mxu0 0.0
    %114 = vmatpush.msra.mxu0 0.0
    %115 = vmatpush.msra.mxu0 0.0
    %116 = vmatpush.msra.mxu0 0.0
    %117 = vmatpush.msra.mxu0 0.0
    %118 = vmatpush.msra.mxu0 0.0
    %119 = vmatpush.msra.mxu0 0.0
    %120 = vmatpush.msra.mxu0 0.0
    %121 = vmatpush.msra.mxu0 %v102
    %122 = vmatpush.msra.mxu0 %v101
    %123 = vmatpush.msra.mxu0 %v100
    %124 = vmatpush.msra.mxu0 %v99
    %125 = vmatmul.f32.gmra.mxu0 %v107
    %v126 = vpop.f32.mrf.mxu0
    %v127 = vadd.f32 %v104, %v126
    %128 = vdwg.mxu0
    %v129 = vmax.f32 %v127, 0.0
    %v130 = vld [vmem:[%s1] sm:$0x7]
    %v131 = vadd.f32 %v68, %v129
    %v132 = vadd.f32 %v131, %v130
    %v133 = vtanh.pop %v132
    %vm134 = vcmask 59392
    %135 = vst.msk [vmem:[#allocation9] sm:$0x7] %vm134, %v133
    %v136 = vld [vmem:[#allocation7] sm:$0x1]
    %v137 = vld [vmem:[%s2 + $0x3] sm:$0x1]
    %v138 = vld [vmem:[#allocation2 + $0x30] sm:$0xff]
    %v139 = vld [vmem:[#allocation2 + $0x38] sm:$0x3f]
    %v140 = vld [vmem:[#allocation2 + $0xa2] sm:$0x1]
    %vm141 = vcmask 113664
    %v143 = vsel %vm141, %v137, 0
    %vm145 = vcmask 1045504
    %v147 = vsel %vm145, %v139, 0
    %149 = vmatpush.msra.mxu0 0.0
    %150 = vmatpush.msra.mxu0 0.0
    %151 = vmatpush.msra.mxu0 0.0
    %152 = vmatpush.msra.mxu0 0.0
    %153 = vmatpush.msra.mxu0 0.0
    %154 = vmatpush.msra.mxu0 0.0
    %155 = vmatpush.msra.mxu0 0.0
    %156 = vmatpush.msra.mxu0 0.0
    %157 = vmatpush.msra.mxu0 0.0
    %158 = vmatpush.msra.mxu0 0.0
    %159 = vmatpush.msra.mxu0 0.0
    %160 = vmatpush.msra.mxu0 0.0
    %161 = vmatpush.msra.mxu0 0.0
    %162 = vmatpush.msra.mxu0 0.0
    %163 = vmatpush.msra.mxu0 %v147
    %164 = vmatpush.msra.mxu0 %v138
    %165 = vmatmul.f32.gmra.mxu0 %v143
    %v166 = vpop.f32.mrf.mxu0
    %v167 = vadd.f32 %v140, %v166
    %168 = vdwg.mxu0
    %v169 = vmax.f32 %v167, 0.0
    %v170 = vld [vmem:[#allocation2 + $0x80] sm:$0xff]
    %v171 = vld [vmem:[#allocation2 + $0x88] sm:$0xff]
    %v172 = vld [vmem:[#allocation2 + $0x90] sm:$0xff]
    %v173 = vld [vmem:[#allocation2 + $0x98] sm:$0xff]
    %v174 = vld [vmem:[#allocation2 + $0xa5] sm:$0x1]
    %v176 = vsel %vm105, %v169, 0
    %178 = vmatpush.msra.mxu0 0.0
    %179 = vmatpush.msra.mxu0 0.0
    %180 = vmatpush.msra.mxu0 0.0
    %181 = vmatpush.msra.mxu0 0.0
    %182 = vmatpush.msra.mxu0 0.0
    %183 = vmatpush.msra.mxu0 0.0
    %184 = vmatpush.msra.mxu0 0.0
    %185 = vmatpush.msra.mxu0 0.0
    %186 = vmatpush.msra.mxu0 0.0
    %187 = vmatpush.msra.mxu0 0.0
    %188 = vmatpush.msra.mxu0 0.0
    %189 = vmatpush.msra.mxu0 0.0
    %190 = vmatpush.msra.mxu0 %v173
    %191 = vmatpush.msra.mxu0 %v172
    %192 = vmatpush.msra.mxu0 %v171
    %193 = vmatpush.msra.mxu0 %v170
    %194 = vmatmul.f32.gmra.mxu0 %v176
    %v195 = vpop.f32.mrf.mxu0
    %v196 = vadd.f32 %v174, %v195
    %197 = vdwg.mxu0
    %v198 = vld [vmem:[%s1 + $0x3] sm:$0x1]
    %v199 = vadd.f32 %v136, %v196
    %v200 = vadd.f32 %v199, %v198
    %v201 = vtanh.pop %v200
    %vm202 = vcmask 57344
    %203 = vst.msk [vmem:[#allocation11] sm:$0x1] %vm202, %v201
    %v204 = vld [vmem:[#allocation2 + $0x40] sm:$0xff]
    %v205 = vld [vmem:[#allocation2 + $0x48] sm:$0xff]
    %v206 = vld [vmem:[#allocation2 + $0x50] sm:$0xff]
    %v207 = vld [vmem:[#allocation2 + $0x58] sm:$0xff]
    %v208 = vld [vmem:[#allocation2 + $0xa3] sm:$0x1]
    %209 = vmatpush.msra.mxu0 0.0
    %210 = vmatpush.msra.mxu0 0.0
    %211 = vmatpush.msra.mxu0 0.0
    %212 = vmatpush.msra.mxu0 0.0
    %213 = vmatpush.msra.mxu0 0.0
    %214 = vmatpush.msra.mxu0 0.0
    %215 = vmatpush.msra.mxu0 0.0
    %216 = vmatpush.msra.mxu0 0.0
    %217 = vmatpush.msra.mxu0 0.0
    %218 = vmatpush.msra.mxu0 0.0
    %219 = vmatpush.msra.mxu0 0.0
    %220 = vmatpush.msra.mxu0 0.0
    %221 = vmatpush.msra.mxu0 %v207
    %222 = vmatpush.msra.mxu0 %v206
    %223 = vmatpush.msra.mxu0 %v205
    %224 = vmatpush.msra.mxu0 %v204
    %225 = vmatmul.f32.gmra.mxu0 %v176
    %v226 = vpop.f32.mrf.mxu0
    %v227 = vadd.f32 %v208, %v226
    %228 = vdwg.mxu0
    %v229 = vld [vmem:[%s1 + $0x4] sm:$0x1]
    %v230 = vadd.f32 %v227, %v229
    %v231 = vld [vmem:[#allocation2 + $0x60] sm:$0xff]
    %v232 = vld [vmem:[#allocation2 + $0x68] sm:$0xff]
    %v233 = vld [vmem:[#allocation2 + $0x70] sm:$0xff]
    %v234 = vld [vmem:[#allocation2 + $0x78] sm:$0xff]
    %v235 = vld [vmem:[#allocation2 + $0xa4] sm:$0x1]
    %236 = vmatpush.msra.mxu0 0.0
    %237 = vmatpush.msra.mxu0 0.0
    %238 = vmatpush.msra.mxu0 0.0
    %239 = vmatpush.msra.mxu0 0.0
    %240 = vmatpush.msra.mxu0 0.0
    %241 = vmatpush.msra.mxu0 0.0
    %242 = vmatpush.msra.mxu0 0.0
    %243 = vmatpush.msra.mxu0 0.0
    %244 = vmatpush.msra.mxu0 0.0
    %245 = vmatpush.msra.mxu0 0.0
    %246 = vmatpush.msra.mxu0 0.0
    %247 = vmatpush.msra.mxu0 0.0
    %248 = vmatpush.msra.mxu0 %v234
    %249 = vmatpush.msra.mxu0 %v233
    %250 = vmatpush.msra.mxu0 %v232
    %251 = vmatpush.msra.mxu0 %v231
    %252 = vmatmul.f32.gmra.mxu0 %v176
    %v253 = vpop.f32.mrf.mxu0
    %v254 = vadd.f32 %v235, %v253
    %255 = vdwg.mxu0
    %v256 = vld [vmem:[%s1 + $0x5] sm:$0x1]
    %v257 = vadd.f32 %v254, %v256
    %vm258 = vcmask 40960
    %v259 = vsel %vm258, %v257, -inf
    %260 = vmax.xlane.f32.xlu0 %v259
    %v261 = vpop.xlane.xlu0 %260
    %v262 = vsub.f32 %v257, %v261
    %v263 = vmul.f32 %v262, 1.442695
    %v264 = vpow.pop %v263
    %v265 = vsel %vm258, %v264, 0.0
    %266 = vadd.xlane.f32.xlu0 %v265
    %v267 = vpop.xlane.xlu0 %266
    %v268 = vrcp.pop %v267
    %v269 = vmul.f32 %v267, %v268
    %v270 = vsub.f32 1.0, %v269
    %v271 = vmul.f32 %v268, %v270
    %v272 = vadd.f32 %v268, %v271
    %vm273 = vweird.f32 %v267
    %vm274 = vweird.f32 %v268
    %vm275 = vmor %vm273, %vm274
    %v276 = vsel %vm275, %v268, %v272
    %v277 = vand.u32 2147483647, %v267
    %vm278 = vcmp.eq.f32.partialorder %v277, 8.507059e+37
    %v279 = vand.u32 %v267, 2147483648
    %v280 = vor.u32 1.1754944e-38, %v279
    %v281 = vsel %vm278, %v280, %v276
    %v282 = vmul.f32 %v264, %v281
    %283 = vst [vmem:[#allocation8] sm:$0x3] 0.0
    %vm284 = vcmask 24576
    %285 = vst.msk [vmem:[#allocation8] sm:$0x1] %vm284, %v230
    %286 = vst.msk [vmem:[#allocation8 + $0x1] sm:$0x1] %vm258, %v282
    // Predicated region
    $region34: #{tpu_custom_call.1} parent=1 // pred_check
      _
    $region35: #{tpu_custom_call.1} parent=1 // pred_check_branch
      %288 = sbr.rel (0) target = $region37
    $region36: #{tpu_custom_call.1} parent=1 // pred_region
      %290 = vsyncadd [#allocation4], 0
      %s292 = sshll.u32 [#allocation8], 4
      %s293 = int_to_ptr.vmem [resolvable:$true] %s292
      %s294 = sshll.u32 %s5, 4
      %s295 = int_to_ptr.hbm [resolvable:$true] %s294
      %297 = dma.vmem_to_hbm [thread:$0]  %s293, 32, %s295, [#allocation4]
    $region37: #{tpu_custom_call.1} parent=1 // pred_fallthru
      _
    // Predicated region
    $region38: #{tpu_custom_call.1} parent=1 // pred_check
      _
    $region39: #{tpu_custom_call.1} parent=1 // pred_check_branch
      %299 = sbr.rel (0) target = $region41
    $region40: #{tpu_custom_call.1} parent=1 // pred_region
      %301 = vsyncadd [#allocation10], 0
      %s303 = sshll.u32 [#allocation9], 4
      %s304 = int_to_ptr.vmem [resolvable:$true] %s303
      %s305 = sshll.u32 %s6, 4
      %s306 = int_to_ptr.hbm [resolvable:$true] %s305
      %308 = dma.vmem_to_hbm [thread:$0]  %s304, 64, %s306, [#allocation10]
    $region41: #{tpu_custom_call.1} parent=1 // pred_fallthru
      _
    // Predicated region
    $region42: #{tpu_custom_call.1} parent=1 // pred_check
      _
    $region43: #{tpu_custom_call.1} parent=1 // pred_check_branch
      %310 = sbr.rel (0) target = $region45
    $region44: #{tpu_custom_call.1} parent=1 // pred_region
      %312 = vsyncadd [#allocation10], 0
      %s314 = sshll.u32 [#allocation11], 4
      %s315 = int_to_ptr.vmem [resolvable:$true] %s314
      %s316 = sshll.u32 %s7, 4
      %s317 = int_to_ptr.hbm [resolvable:$true] %s316
      %319 = dma.vmem_to_hbm [thread:$0]  %s315, 16, %s317, [#allocation10]
    $region45: #{tpu_custom_call.1} parent=1 // pred_fallthru
      _
    // Predicated region
    $region46: #{tpu_custom_call.1} parent=1 // pred_check
      _
    $region47: #{tpu_custom_call.1} parent=1 // pred_check_branch
      %321 = sbr.rel (0) target = $region49
    $region48: #{tpu_custom_call.1} parent=1 // pred_region
      %323 = dma.done [#allocation4], 32
    $region49: #{tpu_custom_call.1} parent=1 // pred_fallthru
      _
    // Predicated region
    $region50: #{tpu_custom_call.1} parent=1 // pred_check
      _
    $region51: #{tpu_custom_call.1} parent=1 // pred_check_branch
      %325 = sbr.rel (0) target = $region53
    $region52: #{tpu_custom_call.1} parent=1 // pred_region
      %327 = dma.done [#allocation10], 64
    $region53: #{tpu_custom_call.1} parent=1 // pred_fallthru
      _
    // Predicated region
    $region54: #{tpu_custom_call.1} parent=1 // pred_check
      _
    $region55: #{tpu_custom_call.1} parent=1 // pred_check_branch
      %329 = sbr.rel (0) target = $region57
    $region56: #{tpu_custom_call.1} parent=1 // pred_region
      %331 = dma.done [#allocation10], 16
    $region57: #{tpu_custom_call.1} parent=1 // pred_fallthru
      _
    %332 = vsyncpa [#allocation3], 1
    %333 = vsyncpa [#allocation6], 1
    %334 = vsyncpa [#allocation4], 1
    %335 = vsyncpa [#allocation10], 1

</llo_original>
